<compile_context>
chip_gen: v5e
topology: v5e:2x2
jax: 0.10.0
libtpu: 0.0.40
codegen_flags: <defaults>
</compile_context>

<pallas_src>
import jax
import jax.numpy as jnp
from jax.experimental import pallas as pl
from jax.experimental.pallas import tpu as pltpu

TEMPERATURE = 0.5
BASE_TEMPERATURE = 0.5
INV_TEMPERATURE = 1.0 / TEMPERATURE


def l2norm_kernel(x_ref, o_ref):
    # x_ref / o_ref: (TR, Dp) row tile.
    x = x_ref[...]
    ssq = jnp.sum(x * x, axis=-1, keepdims=True)
    # == x / max(||x||, 1e-12)  (F.normalize semantics); rsqrt runs on the EUP.
    o_ref[...] = x * jax.lax.rsqrt(jnp.maximum(ssq, 1e-24))


def supcon_tile_kernel(f_ref, albl_ref, clbl_ref, out_ref):
    # f_ref:    (M, Dp)  L2-normalized contrast features (constant block, resident)
    # albl_ref: (1, TM)  anchor labels tile (int32)
    # clbl_ref: (M, 1)   contrast labels (int32, constant block)
    # out_ref:  (1, TM)  per-anchor loss (lane-dense)
    i = pl.program_id(0)
    m = f_ref.shape[0]
    tm = out_ref.shape[1]
    start = pl.multiple_of(i * tm, tm)

    c_n = f_ref[...]
    # Anchor tile = aligned slice of the resident contrast block; fold 1/T here
    # (TM*Dp muls per step instead of an (M, TM) post-matmul scale).
    a_n = f_ref[pl.ds(start, tm), :] * INV_TEMPERATURE

    # logits[contrast, anchor]: contract last dim with last dim (no transpose).
    logits = jax.lax.dot_general(
        c_n, a_n, dimension_numbers=(((1,), (1,)), ((), ())),
        preferred_element_type=jnp.float32)                      # (M, TM)

    # Numerical stabilization: per-anchor max over the full contrast set
    # (diagonal included, exactly as the reference does).
    logits = logits - jnp.max(logits, axis=0, keepdims=True)

    # Self-contrast (diagonal) mask from two thin iotas.
    contrast_ids = jax.lax.broadcasted_iota(jnp.int32, (m, 1), 0)         # (M, 1)
    anchor_ids = jax.lax.broadcasted_iota(jnp.int32, (1, tm), 1) + start  # (1, TM)
    is_self = contrast_ids == anchor_ids                                  # (M, TM)

    exp_l = jnp.where(is_self, 0.0, jnp.exp(logits))
    log_denom = jnp.log(jnp.sum(exp_l, axis=0, keepdims=True))            # (1, TM)

    # Positive-pair mask fused directly into the reductions (no f32 mask buffer).
    pos = jnp.logical_and(clbl_ref[...] == albl_ref[...],
                          jnp.logical_not(is_self))                        # (M, TM)
    pos_cnt = jnp.sum(jnp.where(pos, 1.0, 0.0), axis=0, keepdims=True)     # (1, TM)
    pos_logit_sum = jnp.sum(jnp.where(pos, logits, 0.0), axis=0, keepdims=True)
    safe_cnt = jnp.where(pos_cnt < 1e-6, 1.0, pos_cnt)

    # sum_pos(log_prob) = sum_pos(logits) - pos_cnt * log(denom)  (no (M,TM) log_prob)
    mean_log_prob_pos = (pos_logit_sum - pos_cnt * log_denom) / safe_cnt
    out_ref[...] = (-(TEMPERATURE / BASE_TEMPERATURE)) * mean_log_prob_pos


def _pick_tm(m, dp):
    # Largest lane-aligned anchor tile whose working set (resident (M,Dp) block
    # + ~5 live (M,TM) f32 intermediates) stays comfortably inside v7x VMEM.
    for tm in (512, 256, 128):
        if m % tm == 0 and 4 * (2 * m * dp + 5 * m * tm) <= 48 * 1024 * 1024:
            return tm
    if m % 128 == 0:
        return 128
    return m


def _pick_rows(m):
    for tr in (1024, 512, 256, 128, 64, 32, 16, 8):
        if m % tr == 0:
            return tr
    return m


def _l2_normalize(feats):
    m, dp = feats.shape
    tr = _pick_rows(m)
    return pl.pallas_call(
        l2norm_kernel,
        out_shape=jax.ShapeDtypeStruct((m, dp), jnp.float32),
        grid=(m // tr,),
        in_specs=[pl.BlockSpec((tr, dp), lambda i: (i, 0))],
        out_specs=pl.BlockSpec((tr, dp), lambda i: (i, 0)),
        compiler_params=pltpu.CompilerParams(
            dimension_semantics=("parallel",)),
        cost_estimate=pl.CostEstimate(
            flops=3 * m * dp, transcendentals=m, bytes_accessed=2 * m * dp * 4),
    )(feats)


def cross_sample_consistency(features, labels):
    """features: [bsz, n_views, D]; labels: [bsz] (int). Returns scalar loss."""
    bsz, n_views, d = features.shape
    M = n_views * bsz

    # View-major concatenation: row = v * bsz + b  (== torch.cat(torch.unbind(f, 1))).
    feats = jnp.transpose(features, (1, 0, 2)).reshape(M, d).astype(jnp.float32)

    # Zero-pad D to a lane-aligned width (exact for both the L2 norm and the dot).
    dp = ((d + 127) // 128) * 128
    if dp != d:
        feats = jnp.pad(feats, ((0, 0), (0, dp - d)))

    feats_n = _l2_normalize(feats)

    lab = jnp.tile(labels.astype(jnp.int32), n_views)    # (M,)
    labels_row = lab.reshape(1, M)                        # anchor labels (lane-major)
    labels_col = lab.reshape(M, 1)                        # contrast labels (sublane-major)

    tm = _pick_tm(M, dp)
    grid = (M // tm,)

    cost = pl.CostEstimate(
        flops=2 * M * M * dp + 8 * M * M,
        transcendentals=M * M + M,
        bytes_accessed=M * dp * 4 + 4 * M * 4,
    )

    # VMEM budget: (double-buffered) resident contrast block + labels + ~5 live
    # (M, TM) f32 intermediates, with headroom; capped at v7x's 64 MiB.
    vmem_bytes = 4 * (2 * M * dp + 4 * M + 8 * tm + 5 * M * tm)
    vmem_bytes = int(min(max(2 * vmem_bytes, 16 * 1024 * 1024), 64 * 1024 * 1024))

    per_anchor = pl.pallas_call(
        supcon_tile_kernel,
        out_shape=jax.ShapeDtypeStruct((1, M), jnp.float32),
        grid=grid,
        in_specs=[
            pl.BlockSpec((M, dp), lambda i: (0, 0)),   # normalized contrast (resident)
            pl.BlockSpec((1, tm), lambda i: (0, i)),   # anchor labels tile
            pl.BlockSpec((M, 1), lambda i: (0, 0)),    # contrast labels
        ],
        out_specs=pl.BlockSpec((1, tm), lambda i: (0, i)),
        compiler_params=pltpu.CompilerParams(
            dimension_semantics=("parallel",),
            vmem_limit_bytes=vmem_bytes,
        ),
        cost_estimate=cost,
    )(feats_n, labels_row, labels_col)

    # loss.view(anchor_count, batch_size).mean() == mean over all M anchors.
    return jnp.mean(per_anchor)


def _reference_loss(features, labels):
    """Pure-JAX reference of SupConLoss (temperature=base_temperature=0.5)."""
    bsz, n_views, d = features.shape
    f = features / jnp.maximum(
        jnp.linalg.norm(features, axis=-1, keepdims=True), 1e-12)
    cf = jnp.transpose(f, (1, 0, 2)).reshape(n_views * bsz, d)
    logits = cf @ cf.T / TEMPERATURE
    logits = logits - jnp.max(logits, axis=1, keepdims=True)
    lab = jnp.tile(labels, n_views)
    mask = (lab[:, None] == lab[None, :]).astype(jnp.float32)
    lm = 1.0 - jnp.eye(n_views * bsz, dtype=jnp.float32)
    mask = mask * lm
    exp_logits = jnp.exp(logits) * lm
    log_prob = logits - jnp.log(jnp.sum(exp_logits, axis=1, keepdims=True))
    pp = jnp.sum(mask, axis=1)
    pp = jnp.where(pp < 1e-6, 1.0, pp)
    mlpp = jnp.sum(mask * log_prob, axis=1) / pp
    return jnp.mean(-(TEMPERATURE / BASE_TEMPERATURE) * mlpp)


if __name__ == "__main__":
    key = jax.random.PRNGKey(0)
    bsz, n_views, d = 8, 2, 32
    kf, kl = jax.random.split(key)
    features = jax.random.normal(kf, (bsz, n_views, d), dtype=jnp.float32)
    labels = jax.random.randint(kl, (bsz,), 0, 3)

    loss = jax.jit(cross_sample_consistency)(features, labels)
    loss = jax.block_until_ready(loss)

    ref = _reference_loss(features, labels)
    assert jnp.allclose(loss, ref, rtol=1e-5, atol=1e-5), (loss, ref)
    print("KERNEL_OK")
</pallas_src>

<mosaic_0001>
module attributes {stable_mosaic.version = 11 : i64} {
  func.func @l2norm_kernel(%arg0: i32, %arg1: memref<16x128xf32, #tpu.memory_space<vmem>>, %arg2: memref<16x128xf32, #tpu.memory_space<vmem>>) attributes {dimension_semantics = [#tpu.dimension_semantics<parallel>], iteration_bounds = array<i64: 1>, scalar_prefetch = 0 : i64, scratch_operands = 0 : i64, tpu.core_type = #tpu.core_type<tc>, window_params = [{transform_indices = @transform_0, window_bounds = array<i64: 16, 128>}, {transform_indices = @transform_1, window_bounds = array<i64: 16, 128>}]} {
    %c0 = arith.constant 0 : index
    %c0_0 = arith.constant 0 : index
    %0 = vector.load %arg1[%c0, %c0_0] : memref<16x128xf32, #tpu.memory_space<vmem>>, vector<16x128xf32>
    %1 = arith.mulf %0, %0 : vector<16x128xf32>
    %cst = arith.constant dense<0.000000e+00> : vector<16xf32>
    %2 = vector.multi_reduction <add>, %1, %cst [1] : vector<16x128xf32> to vector<16xf32>
    %3 = vector.shape_cast %2 : vector<16xf32> to vector<16x1xf32>
    %cst_1 = arith.constant 1.000000e-24 : f32
    %4 = vector.broadcast %cst_1 : f32 to vector<16x1xf32>
    %5 = arith.maximumf %3, %4 : vector<16x1xf32>
    %6 = math.rsqrt %5 : vector<16x1xf32>
    %7 = vector.broadcast %6 : vector<16x1xf32> to vector<16x128xf32>
    %8 = arith.mulf %0, %7 : vector<16x128xf32>
    %c0_2 = arith.constant 0 : index
    %c0_3 = arith.constant 0 : index
    %9 = vector.load %arg2[%c0_2, %c0_3] : memref<16x128xf32, #tpu.memory_space<vmem>>, vector<16x128xf32>
    tpu.vector_store %arg2[%c0_2, %c0_3], %8 {strides = array<i32>} : memref<16x128xf32, #tpu.memory_space<vmem>>, vector<16x128xf32>,
    return
  }
  func.func @transform_0(%arg0: i32) -> (i32, i32) {
    %c0_i32 = arith.constant 0 : i32
    %c0_i32_0 = arith.constant 0 : i32
    return %arg0, %c0_i32 : i32, i32
  }
  func.func @transform_1(%arg0: i32) -> (i32, i32) {
    %c0_i32 = arith.constant 0 : i32
    %c0_i32_0 = arith.constant 0 : i32
    return %arg0, %c0_i32 : i32, i32
  }
}

module attributes {stable_mosaic.version = 11 : i64} {
  func.func @supcon_tile_kernel(%arg0: i32, %arg1: memref<16x128xf32, #tpu.memory_space<vmem>>, %arg2: memref<1x16xi32, #tpu.memory_space<vmem>>, %arg3: memref<16x1xi32, #tpu.memory_space<vmem>>, %arg4: memref<1x16xf32, #tpu.memory_space<vmem>>) attributes {dimension_semantics = [#tpu.dimension_semantics<parallel>], iteration_bounds = array<i64: 1>, scalar_prefetch = 0 : i64, scratch_operands = 0 : i64, tpu.core_type = #tpu.core_type<tc>, window_params = [{pipeline_mode = #tpu.pipeline_mode<synchronous>, transform_indices = @transform_0, window_bounds = array<i64: 16, 128>}, {transform_indices = @transform_1, window_bounds = array<i64: 1, 16>}, {pipeline_mode = #tpu.pipeline_mode<synchronous>, transform_indices = @transform_2, window_bounds = array<i64: 16, 1>}, {transform_indices = @transform_3, window_bounds = array<i64: 1, 16>}]} {
    %c16_i32 = arith.constant 16 : i32
    %0 = arith.muli %arg0, %c16_i32 : i32
    %1 = tpu.assume_multiple %0, 16 : i32
    %c0 = arith.constant 0 : index
    %c0_0 = arith.constant 0 : index
    %2 = vector.load %arg1[%c0, %c0_0] : memref<16x128xf32, #tpu.memory_space<vmem>>, vector<16x128xf32>
    %3 = arith.index_cast %1 : i32 to index
    %c0_1 = arith.constant 0 : index
    %4 = vector.load %arg1[%3, %c0_1] : memref<16x128xf32, #tpu.memory_space<vmem>>, vector<16x128xf32>
    %cst = arith.constant 2.000000e+00 : f32
    %5 = vector.broadcast %cst : f32 to vector<16x128xf32>
    %6 = arith.mulf %4, %5 : vector<16x128xf32>
    %cst_2 = arith.constant dense<0.000000e+00> : vector<16x16xf32>
    %7 = tpu.matmul %2, %6, %cst_2 {dimension_numbers = #tpu.dot_dimension_numbers<[1], [1], [0], [0], [0, 0, 1, 0], [], []>} : vector<16x128xf32>, vector<16x128xf32>, vector<16x16xf32> -> vector<16x16xf32>
    %cst_3 = arith.constant dense<0xFF800000> : vector<16xf32>
    %8 = vector.multi_reduction <maximumf>, %7, %cst_3 [0] : vector<16x16xf32> to vector<16xf32>
    %9 = vector.shape_cast %8 : vector<16xf32> to vector<1x16xf32>
    %10 = vector.broadcast %9 : vector<1x16xf32> to vector<16x16xf32>
    %11 = arith.subf %7, %10 : vector<16x16xf32>
    %12 = tpu.iota {dimensions = array<i32: 0>} : vector<16x1xi32>
    %13 = tpu.iota {dimensions = array<i32: 1>} : vector<1x16xi32>
    %14 = vector.broadcast %1 : i32 to vector<1x16xi32>
    %15 = arith.addi %13, %14 : vector<1x16xi32>
    %16 = vector.broadcast %12 : vector<16x1xi32> to vector<16x16xi32>
    %17 = vector.broadcast %15 : vector<1x16xi32> to vector<16x16xi32>
    %18 = arith.cmpi eq, %16, %17 : vector<16x16xi32>
    %19 = math.exp %11 : vector<16x16xf32>
    %cst_4 = arith.constant 0.000000e+00 : f32
    %20 = vector.broadcast %cst_4 : f32 to vector<16x16xf32>
    %21 = arith.select %18, %20, %19 : vector<16x16xi1>, vector<16x16xf32>
    %cst_5 = arith.constant dense<0.000000e+00> : vector<16xf32>
    %22 = vector.multi_reduction <add>, %21, %cst_5 [0] : vector<16x16xf32> to vector<16xf32>
    %23 = vector.shape_cast %22 : vector<16xf32> to vector<1x16xf32>
    %24 = math.log %23 : vector<1x16xf32>
    %c0_6 = arith.constant 0 : index
    %c0_7 = arith.constant 0 : index
    %25 = vector.load %arg3[%c0_6, %c0_7] : memref<16x1xi32, #tpu.memory_space<vmem>>, vector<16x1xi32>
    %c0_8 = arith.constant 0 : index
    %c0_9 = arith.constant 0 : index
    %26 = vector.load %arg2[%c0_8, %c0_9] : memref<1x16xi32, #tpu.memory_space<vmem>>, vector<1x16xi32>
    %27 = vector.broadcast %25 : vector<16x1xi32> to vector<16x16xi32>
    %28 = vector.broadcast %26 : vector<1x16xi32> to vector<16x16xi32>
    %29 = arith.cmpi eq, %27, %28 : vector<16x16xi32>
    %cst_10 = arith.constant dense<true> : vector<16x16xi1>
    %30 = arith.xori %18, %cst_10 : vector<16x16xi1>
    %31 = arith.andi %29, %30 : vector<16x16xi1>
    %cst_11 = arith.constant 1.000000e+00 : f32
    %cst_12 = arith.constant 0.000000e+00 : f32
    %32 = vector.broadcast %cst_11 : f32 to vector<16x16xf32>
    %33 = vector.broadcast %cst_12 : f32 to vector<16x16xf32>
    %34 = arith.select %31, %32, %33 : vector<16x16xi1>, vector<16x16xf32>
    %cst_13 = arith.constant dense<0.000000e+00> : vector<16xf32>
    %35 = vector.multi_reduction <add>, %34, %cst_13 [0] : vector<16x16xf32> to vector<16xf32>
    %36 = vector.shape_cast %35 : vector<16xf32> to vector<1x16xf32>
    %cst_14 = arith.constant 0.000000e+00 : f32
    %37 = vector.broadcast %cst_14 : f32 to vector<16x16xf32>
    %38 = arith.select %31, %11, %37 : vector<16x16xi1>, vector<16x16xf32>
    %cst_15 = arith.constant dense<0.000000e+00> : vector<16xf32>
    %39 = vector.multi_reduction <add>, %38, %cst_15 [0] : vector<16x16xf32> to vector<16xf32>
    %40 = vector.shape_cast %39 : vector<16xf32> to vector<1x16xf32>
    %cst_16 = arith.constant 9.99999997E-7 : f32
    %41 = vector.broadcast %cst_16 : f32 to vector<1x16xf32>
    %42 = arith.cmpf olt, %36, %41 : vector<1x16xf32>
    %cst_17 = arith.constant 1.000000e+00 : f32
    %43 = vector.broadcast %cst_17 : f32 to vector<1x16xf32>
    %44 = arith.select %42, %43, %36 : vector<1x16xi1>, vector<1x16xf32>
    %45 = arith.mulf %36, %24 : vector<1x16xf32>
    %46 = arith.subf %40, %45 : vector<1x16xf32>
    %47 = arith.divf %46, %44 : vector<1x16xf32>
    %cst_18 = arith.constant -1.000000e+00 : f32
    %48 = vector.broadcast %cst_18 : f32 to vector<1x16xf32>
    %49 = arith.mulf %48, %47 : vector<1x16xf32>
    %c0_19 = arith.constant 0 : index
    %c0_20 = arith.constant 0 : index
    %50 = vector.load %arg4[%c0_19, %c0_20] : memref<1x16xf32, #tpu.memory_space<vmem>>, vector<1x16xf32>
    tpu.vector_store %arg4[%c0_19, %c0_20], %49 {strides = array<i32>} : memref<1x16xf32, #tpu.memory_space<vmem>>, vector<1x16xf32>,
    return
  }
  func.func @transform_0(%arg0: i32) -> (i32, i32) {
    %c0_i32 = arith.constant 0 : i32
    %c0_i32_0 = arith.constant 0 : i32
    %c0_i32_1 = arith.constant 0 : i32
    return %c0_i32, %c0_i32_0 : i32, i32
  }
  func.func @transform_1(%arg0: i32) -> (i32, i32) {
    %c0_i32 = arith.constant 0 : i32
    %c0_i32_0 = arith.constant 0 : i32
    return %c0_i32, %arg0 : i32, i32
  }
  func.func @transform_2(%arg0: i32) -> (i32, i32) {
    %c0_i32 = arith.constant 0 : i32
    %c0_i32_0 = arith.constant 0 : i32
    %c0_i32_1 = arith.constant 0 : i32
    return %c0_i32, %c0_i32_0 : i32, i32
  }
  func.func @transform_3(%arg0: i32) -> (i32, i32) {
    %c0_i32 = arith.constant 0 : i32
    %c0_i32_0 = arith.constant 0 : i32
    return %c0_i32, %arg0 : i32, i32
  }
}

</mosaic_0001>

<llo_original>
// kernel: tile.9
$region0: #{tile.9}
  #allocation0 [shape = 's32[1]{0}', space=sflag, size = 0x4, scoped, tag = 'scoped memory for tile.9']
  %s0 = inlined_call_operand.vmem [shape: s32[8], index: 0, kind: input, shape index: {}]
  %s1 = inlined_call_operand.vmem [shape: s32[2,8], index: 1, kind: output, shape index: {}]
  // Predicated region
  $region2: #{tile.9} parent=0 // pred_check
    _
  $region3: #{tile.9} parent=0 // pred_check_branch
    %3 = sbr.rel (0) target = $region5
  $region4: #{tile.9} parent=0 // pred_region
    _
  $region5: #{tile.9} parent=0 // pred_fallthru
    _
  %v4 = vld [vmem:[%s0] ss:$0 sm:$0xff]
  %5 = vst [vmem:[%s1] sm:$0x3] %v4

// kernel: tile.10
$region0: #{tile.10}
  %s0 = inlined_call_operand.vmem [shape: s32[2,8], index: 0, kind: input, shape index: {}]
  %s1 = inlined_call_operand.vmem [shape: s32[1,16], index: 1, kind: output, shape index: {}]
  $region1: #{tile.10} parent=0
    #allocation0 [shape = 'u8[4096]{0}', space=vmem, size = 0x1000, scoped, tag = 'scoped mem for output reshape']
    #allocation1 [shape = 'u8[4096]{0}', space=vmem, size = 0x1000, scoped, tag = 'scoped mem for input reshape']
    %s3 = ssub.s32 4, 1
    %v4 = vld [vmem:[%s0] sm:%s3]
    %5 = vst [vmem:[#allocation1] sm:%s3] %v4
    %v6 = vld [vmem:[#allocation1] sm:$0x1]
    %vm7 = vcmask 64512
    %8 = vst.msk [vmem:[#allocation0] sm:$0x1] %vm7, %v6
    %s9 = scalar_lea.vmem [#allocation1], 1
    %v10 = vld [vmem:[%s9] sm:$0x1]
    %11 = vrot.lane.b32.xlu0 %v10, 8
    %v12 = vpop.permute.xlu0 %11
    %vm13 = vcmask 130112
    %14 = vst.msk [vmem:[#allocation0] sm:$0x1] %vm13, %v12
    %s16 = ssub.s32 2, 1
    %v17 = vld [vmem:[#allocation0] sm:%s16]
    %s19 = ssub.s32 2, 1
    %20 = vst [vmem:[%s1] sm:%s19] %v17

// kernel: tile.0
$region0: #{tile.0}
  %s0 = inlined_call_operand.vmem [shape: s32[2,8], index: 0, kind: input, shape index: {}]
  %s1 = inlined_call_operand.vmem [shape: s32[16,1], index: 1, kind: output, shape index: {}]
  $region1: #{tile.0} parent=0
    #allocation0 [shape = 'u8[4096]{0}', space=vmem, size = 0x1000, scoped, tag = 'scoped mem for input reshape']
    %s3 = ssub.s32 4, 1
    %v4 = vld [vmem:[%s0] sm:%s3]
    %5 = vst [vmem:[#allocation0] sm:%s3] %v4
    %v6 = vld [vmem:[#allocation0] sm:$0x3]
    %vm7 = vcmask 7168
    %8 = vst.msk [vmem:[%s1] ss:$8 sm:$0x3] %vm7, %v6
    %v9 = vld [vmem:[#allocation0] sm:$0x3]
    %10 = vrot.lane.b32.xlu0 %v9, 127
    %v11 = vpop.permute.xlu0 %10
    %vm12 = vcmask 7168
    %s13 = scalar_lea.vmem %s1, 1
    %14 = vst.msk [vmem:[%s13] ss:$8 sm:$0x3] %vm12, %v11
    %v15 = vld [vmem:[#allocation0] sm:$0x3]
    %16 = vrot.lane.b32.xlu0 %v15, 126
    %v17 = vpop.permute.xlu0 %16
    %vm18 = vcmask 7168
    %s19 = scalar_lea.vmem %s1, 2
    %20 = vst.msk [vmem:[%s19] ss:$8 sm:$0x3] %vm18, %v17
    %v21 = vld [vmem:[#allocation0] sm:$0x3]
    %22 = vrot.lane.b32.xlu0 %v21, 125
    %v23 = vpop.permute.xlu0 %22
    %vm24 = vcmask 7168
    %s25 = scalar_lea.vmem %s1, 3
    %26 = vst.msk [vmem:[%s25] ss:$8 sm:$0x3] %vm24, %v23
    %v27 = vld [vmem:[#allocation0] sm:$0x3]
    %28 = vrot.lane.b32.xlu0 %v27, 124
    %v29 = vpop.permute.xlu0 %28
    %vm30 = vcmask 7168
    %s31 = scalar_lea.vmem %s1, 4
    %32 = vst.msk [vmem:[%s31] ss:$8 sm:$0x3] %vm30, %v29
    %v33 = vld [vmem:[#allocation0] sm:$0x3]
    %34 = vrot.lane.b32.xlu0 %v33, 123
    %v35 = vpop.permute.xlu0 %34
    %vm36 = vcmask 7168
    %s37 = scalar_lea.vmem %s1, 5
    %38 = vst.msk [vmem:[%s37] ss:$8 sm:$0x3] %vm36, %v35
    %v39 = vld [vmem:[#allocation0] sm:$0x3]
    %40 = vrot.lane.b32.xlu0 %v39, 122
    %v41 = vpop.permute.xlu0 %40
    %vm42 = vcmask 7168
    %s43 = scalar_lea.vmem %s1, 6
    %44 = vst.msk [vmem:[%s43] ss:$8 sm:$0x3] %vm42, %v41
    %v45 = vld [vmem:[#allocation0] sm:$0x3]
    %46 = vrot.lane.b32.xlu0 %v45, 121
    %v47 = vpop.permute.xlu0 %46
    %vm48 = vcmask 7168
    %s49 = scalar_lea.vmem %s1, 7
    %50 = vst.msk [vmem:[%s49] ss:$8 sm:$0x3] %vm48, %v47

// kernel: cross_sample_consistency.2
$region0: #{cross_sample_consistency.2}
  #allocation0 [shape = 'u32[]', space=smem, size = 0x4, offset = 0x4, fixed_abs, tag = 'smem constant byte address 0x4 - core index']
  #allocation1 [shape = 'u32[72,128]{1,0:T(1,128)}', space=vmem, size = 0x9000, scoped, tag = 'internal scratch']
  %s0 = inlined_call_operand.vmem [shape: f32[16,128], index: 0, kind: input, shape index: {}]
  %s1 = inlined_call_operand.vmem [shape: f32[16,128], index: 1, kind: output, shape index: {}]
  %s2 = sld [smem:[#allocation0]]
  $region14: #{cross_sample_consistency.2} parent=0
    _
  %s4 = ssub.s32 1, %s2
  %s5 = scalar_select 0, %s4, %s2
  // Predicated region
  $region2: #{cross_sample_consistency.2} parent=0 // pred_check
    _
  $region3: #{cross_sample_consistency.2} parent=0 // pred_check_branch
    %7 = sbr.rel (0) target = $region5
  $region4: #{cross_sample_consistency.2} parent=0 // pred_region
    _
  $region5: #{cross_sample_consistency.2} parent=0 // pred_fallthru
    _
  %v8 = vld [vmem:[%s0] sm:$0xff]
  %v9 = vld [vmem:[%s0 + $0x8] sm:$0xff]
  %v10 = vmul.f32 %v8, %v8
  %v11 = vmul.f32 %v9, %v9
  %12 = vadd.xlane.f32.xlu0 %v10
  %v13 = vpop.xlane.xlu0 %12
  %14 = vadd.xlane.f32.xlu0 %v11
  %v15 = vpop.xlane.xlu0 %14
  %v16 = vmax.f32 %v13, 1e-24
  %v17 = vmax.f32 %v15, 1e-24
  %v18 = vrsqrt.pop %v16
  %v19 = vmul.f32 %v18, %v16
  %v20 = vmul.f32 %v19, %v18
  %v21 = vmul.f32 0.5, %v20
  %v22 = vsub.f32 1.5, %v21
  %v23 = vmul.f32 %v18, %v22
  %vm24 = vweird.f32 %v16
  %vm25 = vweird.f32 %v18
  %vm26 = vmor %vm24, %vm25
  %v27 = vsel %vm26, %v18, %v23
  %v28 = vrsqrt.pop %v17
  %v29 = vmul.f32 %v28, %v17
  %v30 = vmul.f32 %v29, %v28
  %v31 = vmul.f32 0.5, %v30
  %v32 = vsub.f32 1.5, %v31
  %v33 = vmul.f32 %v28, %v32
  %vm34 = vweird.f32 %v17
  %vm35 = vweird.f32 %v28
  %vm36 = vmor %vm34, %vm35
  %v37 = vsel %vm36, %v28, %v33
  %v38 = vmul.f32 %v8, %v27
  %v39 = vmul.f32 %v9, %v37
  %40 = vst [vmem:[%s1] sm:$0xff] %v38
  %41 = vst [vmem:[%s1 + $0x8] sm:$0xff] %v39
  // Predicated region
  $region6: #{cross_sample_consistency.2} parent=0 // pred_check
    _
  $region7: #{cross_sample_consistency.2} parent=0 // pred_check_branch
    %43 = sbr.rel (0) target = $region9
  $region8: #{cross_sample_consistency.2} parent=0 // pred_region
    _
  $region9: #{cross_sample_consistency.2} parent=0 // pred_fallthru
    _
  // Predicated region
  $region10: #{cross_sample_consistency.2} parent=0 // pred_check
    _
  $region11: #{cross_sample_consistency.2} parent=0 // pred_check_branch
    %45 = sbr.rel (0) target = $region13
  $region12: #{cross_sample_consistency.2} parent=0 // pred_region
    _
  $region13: #{cross_sample_consistency.2} parent=0 // pred_fallthru
    _

// kernel: cross_sample_consistency.3
$region0: #{cross_sample_consistency.3}
  #allocation0 [shape = 'u32[]', space=smem, size = 0x4, offset = 0x4, fixed_abs, tag = 'smem constant byte address 0x4 - core index']
  #allocation1 [shape = 'u32[72,128]{1,0:T(1,128)}', space=vmem, size = 0x9000, scoped, tag = 'internal scratch']
  %s0 = inlined_call_operand.vmem [shape: f32[16,128], index: 0, kind: input, shape index: {}]
  %s1 = inlined_call_operand.vmem [shape: s32[1,16], index: 1, kind: input, shape index: {}]
  %s2 = inlined_call_operand.vmem [shape: s32[16,1], index: 2, kind: input, shape index: {}]
  %s3 = inlined_call_operand.vmem [shape: f32[1,16], index: 3, kind: output, shape index: {}]
  %s4 = sld [smem:[#allocation0]]
  $region22: #{cross_sample_consistency.3} parent=0
    _
  %s6 = ssub.s32 1, %s4
  %s7 = scalar_select 0, %s6, %s4
  // Predicated region
  $region2: #{cross_sample_consistency.3} parent=0 // pred_check
    _
  $region3: #{cross_sample_consistency.3} parent=0 // pred_check_branch
    %9 = sbr.rel (0) target = $region5
  $region4: #{cross_sample_consistency.3} parent=0 // pred_region
    _
  $region5: #{cross_sample_consistency.3} parent=0 // pred_fallthru
    _
  // Predicated region
  $region6: #{cross_sample_consistency.3} parent=0 // pred_check
    _
  $region7: #{cross_sample_consistency.3} parent=0 // pred_check_branch
    %11 = sbr.rel (0) target = $region9
  $region8: #{cross_sample_consistency.3} parent=0 // pred_region
    _
  $region9: #{cross_sample_consistency.3} parent=0 // pred_fallthru
    _
  // Predicated region
  $region10: #{cross_sample_consistency.3} parent=0 // pred_check
    _
  $region11: #{cross_sample_consistency.3} parent=0 // pred_check_branch
    %13 = sbr.rel (0) target = $region13
  $region12: #{cross_sample_consistency.3} parent=0 // pred_region
    _
  $region13: #{cross_sample_consistency.3} parent=0 // pred_fallthru
    _
  %s14 = smul.u32 0, 16
  %v15 = vld [vmem:[%s0] sm:$0xff]
  %v16 = vld [vmem:[%s0 + $0x8] sm:$0xff]
  %s17 = scalar_lea.vmem %s0, %s14
  %v18 = vld [vmem:[%s17] sm:$0xff]
  %v19 = vld [vmem:[%s17 + $0x8] sm:$0xff]
  %v20 = vmul.f32 %v18, 2.0
  %v21 = vmul.f32 %v19, 2.0
  %22 = vmatpush.xpose.msra.mxu0 0.0
  %23 = vmatpush.xpose.msra.mxu0 0.0
  %24 = vmatpush.xpose.msra.mxu0 0.0
  %25 = vmatpush.xpose.msra.mxu0 0.0
  %26 = vmatpush.xpose.msra.mxu0 0.0
  %27 = vmatpush.xpose.msra.mxu0 0.0
  %28 = vmatpush.xpose.msra.mxu0 0.0
  %29 = vmatpush.xpose.msra.mxu0 0.0
  %30 = vmatpush.xpose.msra.mxu0 0.0
  %31 = vmatpush.xpose.msra.mxu0 0.0
  %32 = vmatpush.xpose.msra.mxu0 0.0
  %33 = vmatpush.xpose.msra.mxu0 0.0
  %34 = vmatpush.xpose.msra.mxu0 0.0
  %35 = vmatpush.xpose.msra.mxu0 0.0
  %36 = vmatpush.xpose.msra.mxu0 %v21
  %37 = vmatpush.xpose.msra.mxu0 %v20
  %38 = vmatmul.f32.gmra.mxu0 %v15
  %v39 = vpop.f32.mrf.mxu0
  %v40 = vadd.f32 0.0, %v39
  %41 = vmatmul.f32.gmra.mxu0 %v16
  %v42 = vpop.f32.mrf.mxu0
  %v43 = vadd.f32 0.0, %v42
  %44 = vdwg.mxu0
  %vm45 = vcmask 130048
  %v46 = vsel %vm45, %v40, -inf
  %v47 = vsel %vm45, %v43, -inf
  %v48 = vmax.f32 %v46, %v47
  %v49 = vrot.slane %v48, 4
  %v50 = vmax.f32 %v48, %v49
  %v51 = vrot.slane %v50, 2
  %v52 = vmax.f32 %v50, %v51
  %v53 = vrot.slane %v52, 1
  %v54 = vmax.f32 %v52, %v53
  %v55 = vsub.f32 %v40, %v54
  %v56 = vsub.f32 %v43, %v54
  %v57 = vlaneseq
  %v58 = vshrl.u32 %v57, 7
  %v59 = vadd.s32 %v58, 8
  %v60 = vlaneseq
  %v61 = vand.u32 %v60, 127
  %v62 = vstv %s14
  %v63 = vadd.s32 %v61, %v62
  %vm64 = vcmp.eq.s32.totalorder %v58, %v63
  %vm65 = vcmp.eq.s32.totalorder %v59, %v63
  %v66 = vmul.f32 %v55, 1.442695
  %v67 = vpow.pop %v66
  %v68 = vmul.f32 %v56, 1.442695
  %v69 = vpow.pop %v68
  %v70 = vsel %vm64, 0.0, %v67
  %v71 = vsel %vm65, 0.0, %v69
  %v72 = vsel %vm45, %v70, 0.0
  %v73 = vsel %vm45, %v71, 0.0
  %v74 = vadd.f32 %v72, %v73
  %v75 = vrot.slane %v74, 4
  %v76 = vadd.f32 %v74, %v75
  %v77 = vrot.slane %v76, 2
  %v78 = vadd.f32 %v76, %v77
  %v79 = vrot.slane %v78, 1
  %v80 = vadd.f32 %v78, %v79
  %v81 = vlog2.pop %v80
  %v82 = vmul.f32 %v81, 0.6931472
  %v83 = vld [vmem:[%s2] sm:$0xff]
  %v84 = vld [vmem:[%s2 + $0x8] sm:$0xff]
  %v85 = vld [vmem:[%s1] sm:$0x1]
  %86 = vset.pattern.permute.xlu0 0
  %87 = vperm.xlu0 %86, %v83
  %v88 = vpop.permute.xlu0 %87
  %89 = vset.pattern.permute.xlu0 0
  %90 = vperm.xlu0 %89, %v84
  %v91 = vpop.permute.xlu0 %90
  %v92 = vperm.slane %v85, 0
  %vm93 = vcmp.eq.s32.totalorder %v88, %v92
  %vm94 = vcmp.eq.s32.totalorder %v91, %v92
  %vm95 = vmxor %vm64, 1
  %vm96 = vmxor %vm65, 1
  %vm97 = vmand %vm93, %vm95
  %vm98 = vmand %vm94, %vm96
  %v99 = vsel %vm97, 1.0, 0.0
  %v100 = vsel %vm98, 1.0, 0.0
  %v101 = vsel %vm45, %v99, 0.0
  %v102 = vsel %vm45, %v100, 0.0
  %v103 = vadd.f32 %v101, %v102
  %v104 = vrot.slane %v103, 4
  %v105 = vadd.f32 %v103, %v104
  %v106 = vrot.slane %v105, 2
  %v107 = vadd.f32 %v105, %v106
  %v108 = vrot.slane %v107, 1
  %v109 = vadd.f32 %v107, %v108
  %v110 = vsel %vm97, %v55, 0.0
  %v111 = vsel %vm98, %v56, 0.0
  %v112 = vsel %vm45, %v110, 0.0
  %v113 = vsel %vm45, %v111, 0.0
  %v114 = vadd.f32 %v112, %v113
  %v115 = vrot.slane %v114, 4
  %v116 = vadd.f32 %v114, %v115
  %v117 = vrot.slane %v116, 2
  %v118 = vadd.f32 %v116, %v117
  %v119 = vrot.slane %v118, 1
  %v120 = vadd.f32 %v118, %v119
  %vm121 = vcmp.lt.f32.partialorder %v109, 1e-06
  %v122 = vsel %vm121, 1.0, %v109
  %v123 = vmul.f32 %v109, %v82
  %v124 = vsub.f32 %v120, %v123
  %v125 = vrcp.pop %v122
  %v126 = vmul.f32 %v122, %v125
  %v127 = vsub.f32 1.0, %v126
  %v128 = vmul.f32 %v125, %v127
  %v129 = vadd.f32 %v125, %v128
  %vm130 = vweird.f32 %v122
  %vm131 = vweird.f32 %v125
  %vm132 = vmor %vm130, %vm131
  %v133 = vsel %vm132, %v125, %v129
  %v134 = vand.u32 2147483647, %v122
  %vm135 = vcmp.eq.f32.partialorder %v134, 8.507059e+37
  %v136 = vand.u32 %v122, 2147483648
  %v137 = vor.u32 1.1754944e-38, %v136
  %v138 = vsel %vm135, %v137, %v133
  %v139 = vmul.f32 %v124, %v138
  %v140 = vmul.f32 %v139, -1.0
  %vm141 = vcmask 122880
  %142 = vst.msk [vmem:[%s3] sm:$0x1] %vm141, %v140
  // Predicated region
  $region14: #{cross_sample_consistency.3} parent=0 // pred_check
    _
  $region15: #{cross_sample_consistency.3} parent=0 // pred_check_branch
    %144 = sbr.rel (0) target = $region17
  $region16: #{cross_sample_consistency.3} parent=0 // pred_region
    _
  $region17: #{cross_sample_consistency.3} parent=0 // pred_fallthru
    _
  // Predicated region
  $region18: #{cross_sample_consistency.3} parent=0 // pred_check
    _
  $region19: #{cross_sample_consistency.3} parent=0 // pred_check_branch
    %146 = sbr.rel (0) target = $region21
  $region20: #{cross_sample_consistency.3} parent=0 // pred_region
    _
  $region21: #{cross_sample_consistency.3} parent=0 // pred_fallthru
    _

</llo_original>
